<compile_context>
chip_gen: v7x
topology: tpu7x:2x2x1
jax: 0.10.0
libtpu: 0.0.40
codegen_flags: <defaults>
</compile_context>

<pallas_src>
import jax
import jax.numpy as jnp
from jax.experimental import pallas as pl
from jax.experimental.pallas import tpu as pltpu


_LANES = 512        # lane-dense slab width (multiple of 128, even)
_TILE_ROWS = 2048   # rows per grid step -> 4 MiB f32 per input tile


def _linear2_lane_kernel(coef_ref, x_ref, o_ref):
    """Lane-wise Linear(2,2) on an interleaved (rows, LANES) slab.

    Row-major flattening of (B, 2) puts feature 0 on even lanes and feature 1
    on odd lanes of the same sample.  The 2x2 matmul becomes three full-width
    VPU FMAs plus two XLU lane rotations that fetch the partner feature.
    """
    x = x_ref[...]                       # (tr, L) f32
    L = x.shape[-1]

    wdiag = coef_ref[0:1, :]             # even lanes: W00, odd lanes: W11
    woff_e = coef_ref[1:2, :]            # even lanes: W01, odd lanes: 0
    woff_o = coef_ref[2:3, :]            # even lanes: 0,   odd lanes: W10
    bvec = coef_ref[3:4, :]              # even lanes: b0,  odd lanes: b1

    # np.roll semantics: result[j] = x[(j - shift) % L]
    x_next = pltpu.roll(x, shift=L - 1, axis=1)   # x[j + 1]: odd partner of an even lane
    x_prev = pltpu.roll(x, shift=1, axis=1)       # x[j - 1]: even partner of an odd lane
    # Wrap-around lanes are multiplied by the 0 entries of woff_e / woff_o.

    o_ref[...] = x * wdiag + x_next * woff_e + x_prev * woff_o + bvec


def linear_forward(x, weight, bias, *, lanes=_LANES, tile_rows=_TILE_ROWS):
    """x: (B, 2) f32, weight: (2, 2) f32 (out_f, in_f), bias: (2,) f32."""
    B, in_f = x.shape
    out_f, in_f_w = weight.shape
    assert in_f == 2 and out_f == 2 and in_f_w == 2, "specialized for Linear(2, 2)"
    assert lanes % 128 == 0 and lanes % 2 == 0

    x = x.astype(jnp.float32)
    w = weight.astype(jnp.float32)
    b = bias.astype(jnp.float32)

    # ---- lane-dense relayout: (B, 2) -> (rows, lanes) slab ----------------
    n = B * in_f
    rows = pl.cdiv(n, lanes)
    flat = x.reshape(-1)
    pad = rows * lanes - n
    if pad:
        flat = jnp.pad(flat, (0, pad))      # padded lanes are sliced off below
    slab = flat.reshape(rows, lanes)

    # ---- lane-periodic coefficient slab (built once, tiny, stays in VMEM) --
    even = (jnp.arange(lanes) % 2) == 0
    wdiag = jnp.where(even, w[0, 0], w[1, 1])
    woff_e = jnp.where(even, w[0, 1], 0.0)
    woff_o = jnp.where(even, 0.0, w[1, 0])
    bvec = jnp.where(even, b[0], b[1])
    zero = jnp.zeros((lanes,), jnp.float32)
    coef = jnp.stack([wdiag, woff_e, woff_o, bvec, zero, zero, zero, zero], axis=0)

    # ---- row tiling (sublane multiple; full-extent block for small inputs) --
    if rows <= tile_rows:
        tr = rows
    else:
        tr = max(8, (tile_rows // 8) * 8)
    grid = (pl.cdiv(rows, tr),)

    out_slab = pl.pallas_call(
        _linear2_lane_kernel,
        out_shape=jax.ShapeDtypeStruct((rows, lanes), jnp.float32),
        grid=grid,
        in_specs=[
            pl.BlockSpec((8, lanes), lambda i: (0, 0)),    # coef, resident
            pl.BlockSpec((tr, lanes), lambda i: (i, 0)),   # x slab tile
        ],
        out_specs=pl.BlockSpec((tr, lanes), lambda i: (i, 0)),
        compiler_params=pltpu.CompilerParams(
            dimension_semantics=("parallel",)),
    )(coef, slab)

    return out_slab.reshape(-1)[:n].reshape(B, out_f)


if __name__ == "__main__":
    key = jax.random.PRNGKey(0)
    kx, kw, kb = jax.random.split(key, 3)

    B, in_f, out_f = 8, 2, 2

    # Mimics PyTorch Linear's U(-1/sqrt(in_f), 1/sqrt(in_f)) init.
    bound = 1.0 / jnp.sqrt(jnp.float32(in_f))
    weight = jax.random.uniform(kw, (out_f, in_f), jnp.float32, -bound, bound)
    bias = jax.random.uniform(kb, (out_f,), jnp.float32, -bound, bound)

    x = jax.random.normal(kx, (B, in_f), jnp.float32)

    out = linear_forward(x, weight, bias)
    out = jax.block_until_ready(out)

    ref = x @ weight.T + bias
    assert out.shape == (B, out_f)
    assert jnp.allclose(out, ref, atol=1e-5, rtol=1e-5), "mismatch vs reference"

    # Second check: exercises padding of the lane-dense slab (B*2 % 512 != 0).
    x2 = jax.random.normal(jax.random.PRNGKey(1), (1000, in_f), jnp.float32)
    out2 = jax.block_until_ready(linear_forward(x2, weight, bias))
    ref2 = x2 @ weight.T + bias
    assert jnp.allclose(out2, ref2, atol=1e-5, rtol=1e-5), "mismatch vs reference (padded case)"

    print("KERNEL_OK")
</pallas_src>

<mosaic_0001>
module attributes {stable_mosaic.version = 11 : i64} {
  func.func @_linear2_lane_kernel(%arg0: i32, %arg1: memref<8x512xf32, #tpu.memory_space<vmem>>, %arg2: memref<1x512xf32, #tpu.memory_space<vmem>>, %arg3: memref<1x512xf32, #tpu.memory_space<vmem>>) attributes {dimension_semantics = [#tpu.dimension_semantics<parallel>], iteration_bounds = array<i64: 1>, scalar_prefetch = 0 : i64, scratch_operands = 0 : i64, tpu.core_type = #tpu.core_type<tc>, window_params = [{pipeline_mode = #tpu.pipeline_mode<synchronous>, transform_indices = @transform_0, window_bounds = array<i64: 8, 512>}, {transform_indices = @transform_1, window_bounds = array<i64: 1, 512>}, {transform_indices = @transform_2, window_bounds = array<i64: 1, 512>}]} {
    %c0 = arith.constant 0 : index
    %c0_0 = arith.constant 0 : index
    %0 = vector.load %arg2[%c0, %c0_0] : memref<1x512xf32, #tpu.memory_space<vmem>>, vector<1x512xf32>
    %c0_1 = arith.constant 0 : index
    %c0_2 = arith.constant 0 : index
    %1 = vector.load %arg1[%c0_1, %c0_2] : memref<8x512xf32, #tpu.memory_space<vmem>>, vector<1x512xf32>
    %c1 = arith.constant 1 : index
    %c0_3 = arith.constant 0 : index
    %2 = vector.load %arg1[%c1, %c0_3] : memref<8x512xf32, #tpu.memory_space<vmem>>, vector<1x512xf32>
    %c2 = arith.constant 2 : index
    %c0_4 = arith.constant 0 : index
    %3 = vector.load %arg1[%c2, %c0_4] : memref<8x512xf32, #tpu.memory_space<vmem>>, vector<1x512xf32>
    %c3 = arith.constant 3 : index
    %c0_5 = arith.constant 0 : index
    %4 = vector.load %arg1[%c3, %c0_5] : memref<8x512xf32, #tpu.memory_space<vmem>>, vector<1x512xf32>
    %c511_i32 = arith.constant 511 : i32
    %5 = tpu.dynamic_rotate %0 by %c511_i32 dim 1 : vector<1x512xf32>, i32 -> vector<1x512xf32>
    %c1_i32 = arith.constant 1 : i32
    %6 = tpu.dynamic_rotate %0 by %c1_i32 dim 1 : vector<1x512xf32>, i32 -> vector<1x512xf32>
    %7 = arith.mulf %0, %1 : vector<1x512xf32>
    %8 = arith.mulf %5, %2 : vector<1x512xf32>
    %9 = arith.addf %7, %8 : vector<1x512xf32>
    %10 = arith.mulf %6, %3 : vector<1x512xf32>
    %11 = arith.addf %9, %10 : vector<1x512xf32>
    %12 = arith.addf %11, %4 : vector<1x512xf32>
    %c0_6 = arith.constant 0 : index
    %c0_7 = arith.constant 0 : index
    %13 = vector.load %arg3[%c0_6, %c0_7] : memref<1x512xf32, #tpu.memory_space<vmem>>, vector<1x512xf32>
    tpu.vector_store %arg3[%c0_6, %c0_7], %12 {strides = array<i32>} : memref<1x512xf32, #tpu.memory_space<vmem>>, vector<1x512xf32>,
    return
  }
  func.func @transform_0(%arg0: i32) -> (i32, i32) {
    %c0_i32 = arith.constant 0 : i32
    %c0_i32_0 = arith.constant 0 : i32
    %c0_i32_1 = arith.constant 0 : i32
    return %c0_i32, %c0_i32_0 : i32, i32
  }
  func.func @transform_1(%arg0: i32) -> (i32, i32) {
    %c0_i32 = arith.constant 0 : i32
    %c0_i32_0 = arith.constant 0 : i32
    return %arg0, %c0_i32 : i32, i32
  }
  func.func @transform_2(%arg0: i32) -> (i32, i32) {
    %c0_i32 = arith.constant 0 : i32
    %c0_i32_0 = arith.constant 0 : i32
    return %arg0, %c0_i32 : i32, i32
  }
}

</mosaic_0001>

<llo_original>
// kernel: tpu_custom_call.1
$region0: #{tpu_custom_call.1}
  #allocation0 [shape = 'u32[]', space=smem, size = 0x4, offset = 0x4, fixed_abs, tag = 'smem constant byte address 0x4 - core index']
  #allocation1 [shape = 'u32[144,128]{1,0:T(1,128)}', space=vmem, size = 0x12000, scoped, tag = 'internal scratch']
  %s0 = inlined_call_operand.hbm [shape: f32[8,512], index: 0, kind: input, shape index: {}]
  %s1 = inlined_call_operand.hbm [shape: f32[1,512], index: 1, kind: input, shape index: {}]
  %s2 = inlined_call_operand.hbm [shape: f32[1,512], index: 2, kind: output, shape index: {}]
  %s3 = sld [smem:[#allocation0]]
  $region26: #{tpu_custom_call.1} parent=0
    _
  %s5 = ssub.s32 1, %s3
  %s6 = scalar_select 0, %s5, %s3
  $region1: #{tpu_custom_call.1} parent=0
    #allocation2 [shape = 'u8[16384]{0}', space=vmem, size = 0x4000, scoped, tag = 'input window, operand 0, single buffered']
    #allocation3 [shape = 's32[1]{0}', space=sflag, size = 0x4, scoped, tag = 'scoped memory for tpu_custom_call.1']
    #allocation4 [shape = 's32[1]{0}', space=sflag, size = 0x4, scoped, tag = 'scoped memory for tpu_custom_call.1']
    #allocation5 [shape = 'u8[2048]{0}', space=vmem, size = 0x800, scoped, tag = 'input window, operand 1, single buffered']
    #allocation6 [shape = 's32[1]{0}', space=sflag, size = 0x4, scoped, tag = 'scoped memory for tpu_custom_call.1']
    #allocation7 [shape = 'u8[2048]{0}', space=vmem, size = 0x800, scoped, tag = 'output window, operand 0, single buffered']
    %7 = vsyncpa [#allocation3], 0
    %8 = vsyncpa [#allocation6], 0
    %9 = vsyncpa [#allocation4], 0
    // Predicated region
    $region2: #{tpu_custom_call.1} parent=1 // pred_check
      _
    $region3: #{tpu_custom_call.1} parent=1 // pred_check_branch
      %11 = sbr.rel (0) target = $region5
    $region4: #{tpu_custom_call.1} parent=1 // pred_region
      %s13 = ssub.s32 512, 512
      %14 = vsyncadd [#allocation3], %s13
      %s16 = sshll.u32 [#allocation2], 4
      %s17 = int_to_ptr.vmem [resolvable:$true] %s16
      %19 = dma.hbm_to_vmem [thread:$0]  %s0, 512, %s17, [#allocation3]
    $region5: #{tpu_custom_call.1} parent=1 // pred_fallthru
      _
    // Predicated region
    $region6: #{tpu_custom_call.1} parent=1 // pred_check
      _
    $region7: #{tpu_custom_call.1} parent=1 // pred_check_branch
      %21 = sbr.rel (0) target = $region9
    $region8: #{tpu_custom_call.1} parent=1 // pred_region
      %s23 = ssub.s32 64, 64
      %24 = vsyncadd [#allocation6], %s23
      %s26 = sshll.u32 [#allocation5], 4
      %s27 = int_to_ptr.vmem [resolvable:$true] %s26
      %29 = dma.hbm_to_vmem [thread:$0]  %s1, 64, %s27, [#allocation6]
    $region9: #{tpu_custom_call.1} parent=1 // pred_fallthru
      _
    // Predicated region
    $region10: #{tpu_custom_call.1} parent=1 // pred_check
      _
    $region11: #{tpu_custom_call.1} parent=1 // pred_check_branch
      %31 = sbr.rel (0) target = $region13
    $region12: #{tpu_custom_call.1} parent=1 // pred_region
      %32 = dma.done [#allocation3], 512
    $region13: #{tpu_custom_call.1} parent=1 // pred_fallthru
      _
    // Predicated region
    $region14: #{tpu_custom_call.1} parent=1 // pred_check
      _
    $region15: #{tpu_custom_call.1} parent=1 // pred_check_branch
      %34 = sbr.rel (0) target = $region17
    $region16: #{tpu_custom_call.1} parent=1 // pred_region
      %35 = dma.done [#allocation6], 64
    $region17: #{tpu_custom_call.1} parent=1 // pred_fallthru
      _
    %v36 = vld [vmem:[#allocation5] sm:$0xf]
    %v37 = vld [vmem:[#allocation2] ss:$8 sm:$0xf]
    %s38 = scalar_lea.vmem [#allocation2], 1
    %v39 = vld [vmem:[%s38] ss:$8 sm:$0xf]
    %s40 = scalar_lea.vmem [#allocation2], 2
    %v41 = vld [vmem:[%s40] ss:$8 sm:$0xf]
    %s42 = scalar_lea.vmem [#allocation2], 3
    %v43 = vld [vmem:[%s42] ss:$8 sm:$0xf]
    %v45 = vlaneseq
    %v46 = vshrl.u32 %v45, 7
    %v47 = vsub.s32 0, %v46
    %v48 = vrot.slane %v36, %v47
    %v49 = vlaneseq
    %v50 = vshrl.u32 %v49, 7
    %v51 = vsub.s32 1, %v50
    %v52 = vrot.slane %v36, %v51
    %v53 = vlaneseq
    %v54 = vshrl.u32 %v53, 7
    %v55 = vsub.s32 2, %v54
    %v56 = vrot.slane %v36, %v55
    %v57 = vlaneseq
    %v58 = vshrl.u32 %v57, 7
    %v59 = vsub.s32 3, %v58
    %v60 = vrot.slane %v36, %v59
    %65 = vrot.lane.b32.xlu0 %v48, 127
    %v66 = vpop.permute.xlu0 %65
    %67 = vrot.lane.b32.xlu0 %v52, 127
    %v68 = vpop.permute.xlu0 %67
    %69 = vrot.lane.b32.xlu0 %v56, 127
    %v70 = vpop.permute.xlu0 %69
    %71 = vrot.lane.b32.xlu0 %v60, 127
    %v72 = vpop.permute.xlu0 %71
    %v73 = vlaneseq
    %v74 = vand.u32 %v73, 127
    %vm75 = vcmp.lt.s32.totalorder %v74, 127
    %v76 = vsel %vm75, %v70, %v72
    %v77 = vsel %vm75, %v68, %v70
    %v78 = vsel %vm75, %v66, %v68
    %v79 = vsel %vm75, %v72, %v66
    %80 = vrot.lane.b32.xlu0 %v48, 1
    %v81 = vpop.permute.xlu0 %80
    %82 = vrot.lane.b32.xlu0 %v52, 1
    %v83 = vpop.permute.xlu0 %82
    %84 = vrot.lane.b32.xlu0 %v56, 1
    %v85 = vpop.permute.xlu0 %84
    %86 = vrot.lane.b32.xlu0 %v60, 1
    %v87 = vpop.permute.xlu0 %86
    %vm88 = vcmp.lt.s32.totalorder %v74, 1
    %v89 = vsel %vm88, %v85, %v87
    %v90 = vsel %vm88, %v83, %v85
    %v91 = vsel %vm88, %v81, %v83
    %v92 = vsel %vm88, %v87, %v81
    %v93 = vmul.f32 %v36, %v37
    %v95 = vlaneseq
    %v96 = vshrl.u32 %v95, 7
    %v97 = vsub.s32 0, %v96
    %v98 = vrot.slane %v39, %v97
    %v99 = vlaneseq
    %v100 = vshrl.u32 %v99, 7
    %v101 = vsub.s32 1, %v100
    %v102 = vrot.slane %v39, %v101
    %v103 = vlaneseq
    %v104 = vshrl.u32 %v103, 7
    %v105 = vsub.s32 2, %v104
    %v106 = vrot.slane %v39, %v105
    %v107 = vlaneseq
    %v108 = vshrl.u32 %v107, 7
    %v109 = vsub.s32 3, %v108
    %v110 = vrot.slane %v39, %v109
    %v115 = vmul.f32 %v78, %v98
    %v116 = vmul.f32 %v77, %v102
    %v117 = vmul.f32 %v76, %v106
    %v118 = vmul.f32 %v79, %v110
    %v123 = vcombine.low %v115, %v116
    %v124 = vcombine.low %v117, %v118
    %v126 = vunpack.c.l.s4 1966171168
    %v127 = vunpack.c.0.s8 %v126
    %v128 = vlaneseq
    %v129 = vshrl.u32 %v128, 7
    %v130 = vsub.s32 %v127, %v129
    %v131 = vrot.slane %v123, %v130
    %v133 = vunpack.c.l.s4 1966171168
    %v134 = vunpack.c.0.s8 %v133
    %v135 = vlaneseq
    %v136 = vshrl.u32 %v135, 7
    %v137 = vsub.s32 %v134, %v136
    %v138 = vrot.slane %v124, %v137
    %v139 = vcombine.low %v131, %v138
    %v141 = vunpack.c.l.s4 1966171168
    %v142 = vunpack.c.0.s8 %v141
    %v143 = vlaneseq
    %v144 = vshrl.u32 %v143, 7
    %v145 = vsub.s32 %v142, %v144
    %v146 = vrot.slane %v139, %v145
    %v148 = vadd.f32 %v93, %v146
    %v150 = vlaneseq
    %v151 = vshrl.u32 %v150, 7
    %v152 = vsub.s32 0, %v151
    %v153 = vrot.slane %v41, %v152
    %v154 = vlaneseq
    %v155 = vshrl.u32 %v154, 7
    %v156 = vsub.s32 1, %v155
    %v157 = vrot.slane %v41, %v156
    %v158 = vlaneseq
    %v159 = vshrl.u32 %v158, 7
    %v160 = vsub.s32 2, %v159
    %v161 = vrot.slane %v41, %v160
    %v162 = vlaneseq
    %v163 = vshrl.u32 %v162, 7
    %v164 = vsub.s32 3, %v163
    %v165 = vrot.slane %v41, %v164
    %v170 = vmul.f32 %v92, %v153
    %v171 = vmul.f32 %v91, %v157
    %v172 = vmul.f32 %v90, %v161
    %v173 = vmul.f32 %v89, %v165
    %v178 = vcombine.low %v170, %v171
    %v179 = vcombine.low %v172, %v173
    %v181 = vunpack.c.l.s4 1966171168
    %v182 = vunpack.c.0.s8 %v181
    %v183 = vlaneseq
    %v184 = vshrl.u32 %v183, 7
    %v185 = vsub.s32 %v182, %v184
    %v186 = vrot.slane %v178, %v185
    %v188 = vunpack.c.l.s4 1966171168
    %v189 = vunpack.c.0.s8 %v188
    %v190 = vlaneseq
    %v191 = vshrl.u32 %v190, 7
    %v192 = vsub.s32 %v189, %v191
    %v193 = vrot.slane %v179, %v192
    %v194 = vcombine.low %v186, %v193
    %v196 = vunpack.c.l.s4 1966171168
    %v197 = vunpack.c.0.s8 %v196
    %v198 = vlaneseq
    %v199 = vshrl.u32 %v198, 7
    %v200 = vsub.s32 %v197, %v199
    %v201 = vrot.slane %v194, %v200
    %v203 = vadd.f32 %v148, %v201
    %v204 = vadd.f32 %v203, %v43
    %v205 = vlaneseq
    %vm206 = vcmp.ge.s32.totalorder %v205, 0
    %vm207 = vcmp.lt.s32.totalorder %v205, 512
    %vm208 = vmand %vm206, %vm207
    %209 = vst.msk [vmem:[#allocation7] sm:$0xf] %vm208, %v204
    // Predicated region
    $region18: #{tpu_custom_call.1} parent=1 // pred_check
      _
    $region19: #{tpu_custom_call.1} parent=1 // pred_check_branch
      %211 = sbr.rel (0) target = $region21
    $region20: #{tpu_custom_call.1} parent=1 // pred_region
      %s213 = ssub.s32 64, 64
      %214 = vsyncadd [#allocation4], %s213
      %s216 = sshll.u32 [#allocation7], 4
      %s217 = int_to_ptr.vmem [resolvable:$true] %s216
      %219 = dma.vmem_to_hbm [thread:$0]  %s217, 64, %s2, [#allocation4]
    $region21: #{tpu_custom_call.1} parent=1 // pred_fallthru
      _
    // Predicated region
    $region22: #{tpu_custom_call.1} parent=1 // pred_check
      _
    $region23: #{tpu_custom_call.1} parent=1 // pred_check_branch
      %221 = sbr.rel (0) target = $region25
    $region24: #{tpu_custom_call.1} parent=1 // pred_region
      %222 = dma.done [#allocation4], 64
    $region25: #{tpu_custom_call.1} parent=1 // pred_fallthru
      _
    %223 = vsyncpa [#allocation3], 1
    %224 = vsyncpa [#allocation6], 1
    %225 = vsyncpa [#allocation4], 1

</llo_original>
